<compile_context>
chip_gen: v5e
topology: v5e:2x2
jax: 0.10.0
libtpu: 0.0.40
codegen_flags: <defaults>
</compile_context>

<pallas_src>
import jax
import jax.numpy as jnp
from jax.experimental import pallas as pl
from jax.experimental.pallas import tpu as pltpu


def _round_up(x, m):
    return ((x + m - 1) // m) * m


def _pick_tile(dim_pad, t_default, step):
    """Largest multiple of `step` <= t_default that evenly divides dim_pad."""
    t = min(t_default, dim_pad)
    t = max(step, (t // step) * step)
    while dim_pad % t != 0:
        t -= step
    return t


def _lora_linear_kernel(x_ref, w_ref, d_ref, wu_ref, o_ref, acc_ref):
    """Main GEMM over K with f32 accumulator; LoRA up-projection in epilogue.

    x_ref : (tm, tk)  compute dtype   -- activation tile
    w_ref : (tk, tn)  compute dtype   -- W^T tile
    d_ref : (tm, r)   f32             -- precomputed scale * (x @ Wd^T) rows
    wu_ref: (r, tn)   f32             -- Wu^T tile
    """
    k = pl.program_id(2)

    @pl.when(k == 0)
    def _():
        acc_ref[...] = jnp.zeros_like(acc_ref)

    acc_ref[...] += jnp.dot(x_ref[...], w_ref[...],
                            preferred_element_type=jnp.float32)       # (tm, tn)

    @pl.when(k == pl.num_programs(2) - 1)
    def _():
        # Low-rank up-projection: f32 LHS (no mid-path bf16 rounding), runs
        # once per output tile, K=r is tiny -> negligible MXU cost.
        up = jnp.dot(d_ref[...], wu_ref[...],
                     preferred_element_type=jnp.float32)               # (tm, tn)
        o_ref[...] = (acc_ref[...] + up).astype(o_ref.dtype)


def prepare_lora_linear_params(w, wd, wu, *, compute_dtype=jnp.bfloat16,
                               tn=1024, tk=1024):
    """One-time (module-init analogue) weight prep: transpose, cast, pad to
    MXU-friendly multiples of 256, pick N/K tile sizes.

    w : (out_features, in_features)   -- linear.weight (PyTorch layout)
    wd: (r, in_features)              -- lora_down.weight
    wu: (out_features, r)             -- lora_up.weight
    """
    out_features, in_features = w.shape
    r = wd.shape[0]

    # 256-multiples fill a full 256x256 MXU weight tile on v6e/v7x; v5e's
    # 128x128 MXU is equally happy with them.
    k_pad = _round_up(in_features, 256)
    n_pad = _round_up(out_features, 256)
    r_pad = _round_up(r, 8)

    tk_eff = _pick_tile(k_pad, tk, 256)
    tn_eff = _pick_tile(n_pad, tn, 256)

    w_t = jnp.pad(w.T.astype(compute_dtype),
                  ((0, k_pad - in_features), (0, n_pad - out_features)))
    # Down-projection weight in compute dtype (used by a tiny wrapper-side
    # GEMM); up-projection weight stays f32 (tiny, keeps LoRA path un-rounded).
    wd_t = jnp.pad(wd.T.astype(compute_dtype),
                   ((0, k_pad - in_features), (0, r_pad - r)))
    wu_t = jnp.pad(wu.T.astype(jnp.float32),
                   ((0, r_pad - r), (0, n_pad - out_features)))

    return dict(w_t=w_t, wd_t=wd_t, wu_t=wu_t,
                in_features=in_features, out_features=out_features,
                k_pad=k_pad, n_pad=n_pad, r_pad=r_pad,
                tk=tk_eff, tn=tn_eff, compute_dtype=compute_dtype)


def lora_injected_linear(x, params, *, scale=1.0, tm=1024, out_dtype=None):
    """Fused forward of LoraInjectedLinear (eval mode, bias=False).

    x: (..., in_features); params: output of prepare_lora_linear_params.
    For decode/small-M memory-bound cases consider out_dtype=jnp.bfloat16.
    """
    in_features = params["in_features"]
    out_features = params["out_features"]
    k_pad, n_pad, r_pad = params["k_pad"], params["n_pad"], params["r_pad"]
    tk, tn = params["tk"], params["tn"]
    cdt = params["compute_dtype"]
    out_dtype = out_dtype or x.dtype

    lead = x.shape[:-1]
    x2d = x.reshape(-1, in_features)
    if x2d.dtype != cdt:
        x2d = x2d.astype(cdt)
    m = x2d.shape[0]

    # Near-equal split of M into ceil(m/tm) tiles, rounded to the sublane
    # granularity (16 covers bf16 and f32) -> minimal zero-row padding.
    n_m_tiles = max(1, -(-m // tm))
    tm_eff = _round_up(-(-m // n_m_tiles), 16)
    m_pad = n_m_tiles * tm_eff

    pad_m, pad_k = m_pad - m, k_pad - in_features
    if pad_m or pad_k:
        x2d = jnp.pad(x2d, ((0, pad_m), (0, pad_k)))

    # LoRA down-projection precomputed once outside the kernel: a tiny (m, r)
    # GEMM that XLA handles fine.  Keeps the kernel's hot K loop a pure main
    # GEMM and leaves both M and N grid axes megacore-parallel.  `scale` is
    # folded here (an (m, r) multiply) instead of a per-(tm x tn) epilogue mul.
    d = jnp.dot(x2d, params["wd_t"], preferred_element_type=jnp.float32)
    d = d * jnp.float32(scale)

    grid = (m_pad // tm_eff, n_pad // tn, k_pad // tk)

    out = pl.pallas_call(
        _lora_linear_kernel,
        out_shape=jax.ShapeDtypeStruct((m_pad, n_pad), out_dtype),
        grid_spec=pltpu.PrefetchScalarGridSpec(
            num_scalar_prefetch=0,
            grid=grid,
            in_specs=[
                pl.BlockSpec((tm_eff, tk), lambda mi, ni, ki: (mi, ki)),    # x
                pl.BlockSpec((tk, tn), lambda mi, ni, ki: (ki, ni)),        # W^T
                pl.BlockSpec((tm_eff, r_pad), lambda mi, ni, ki: (mi, 0)),  # x@Wd^T (f32)
                pl.BlockSpec((r_pad, tn), lambda mi, ni, ki: (0, ni)),      # Wu^T (f32)
            ],
            out_specs=pl.BlockSpec((tm_eff, tn), lambda mi, ni, ki: (mi, ni)),
            scratch_shapes=[
                pltpu.VMEM((tm_eff, tn), jnp.float32),   # main f32 accumulator
            ],
        ),
        compiler_params=pltpu.CompilerParams(
            dimension_semantics=("parallel", "parallel", "arbitrary"),
            # ~48 MiB: enough headroom for 1024^2 tiles (f32 worst case ~28 MiB
            # resident) while staying under v7x's 64 MiB physical VMEM.
            vmem_limit_bytes=48 * 1024 * 1024,
        ),
    )(x2d, params["w_t"], d, params["wu_t"])

    out = out[:m, :out_features]
    return out.reshape(*lead, out_features)


if __name__ == "__main__":
    # ---- small demo config matching the module defaults ----
    in_features, out_features, r, scale = 32, 32, 4, 1.0
    batch, seq = 2, 8

    key = jax.random.PRNGKey(0)
    kx, kw, kd, ku = jax.random.split(key, 4)

    x = jax.random.normal(kx, (batch, seq, in_features), dtype=jnp.float32)
    # synthetic params, same shapes/init spirit as the PyTorch module:
    w = jax.random.normal(kw, (out_features, in_features), jnp.float32) * 0.05
    wd = jax.random.normal(kd, (r, in_features), jnp.float32) * (1.0 / r)
    wu0 = jnp.zeros((out_features, r), jnp.float32)          # nn.init.zeros_
    wu1 = jax.random.normal(ku, (out_features, r), jnp.float32) * 0.02

    # --- fp32 compute path (zero lora_up, like freshly-initialized module) ---
    p32 = prepare_lora_linear_params(w, wd, wu0, compute_dtype=jnp.float32)
    out = jax.block_until_ready(lora_injected_linear(x, p32, scale=scale))
    ref = x @ w.T + ((x @ wd.T) @ wu0.T) * scale
    assert out.shape == (batch, seq, out_features)
    assert jnp.allclose(out, ref, atol=1e-4, rtol=1e-4)

    # --- fp32 compute path with non-zero lora_up (LoRA path exercised) ---
    p32b = prepare_lora_linear_params(w, wd, wu1, compute_dtype=jnp.float32)
    out2 = jax.block_until_ready(lora_injected_linear(x, p32b, scale=0.7))
    ref2 = x @ w.T + ((x @ wd.T) @ wu1.T) * 0.7
    assert jnp.allclose(out2, ref2, atol=1e-4, rtol=1e-4)

    # --- bf16 compute path (default) ---
    pbf = prepare_lora_linear_params(w, wd, wu1)   # compute_dtype=bf16
    out3 = jax.block_until_ready(lora_injected_linear(x, pbf, scale=0.7))
    assert out3.dtype == x.dtype
    assert jnp.allclose(out3, ref2, atol=2e-2, rtol=2e-2)

    # --- larger shape to exercise M/N tiling and the K reduction axis ---
    M2, K2, N2, r2 = 600, 640, 384, 4
    k2 = jax.random.PRNGKey(7)
    ka, kb, kc, ke = jax.random.split(k2, 4)
    xL = jax.random.normal(ka, (M2, K2), jnp.float32)
    wL = jax.random.normal(kb, (N2, K2), jnp.float32) * 0.05
    wdL = jax.random.normal(kc, (r2, K2), jnp.float32) * (1.0 / r2)
    wuL = jax.random.normal(ke, (N2, r2), jnp.float32) * 0.02
    pL = prepare_lora_linear_params(wL, wdL, wuL, compute_dtype=jnp.float32)
    outL = jax.block_until_ready(lora_injected_linear(xL, pL, scale=1.0))
    refL = xL @ wL.T + ((xL @ wdL.T) @ wuL.T) * 1.0
    assert outL.shape == (M2, N2)
    assert jnp.allclose(outL, refL, atol=1e-3, rtol=1e-3)

    # --- smaller tile override to force a multi-tile (M, N, K) grid ---
    pS = prepare_lora_linear_params(wL, wdL, wuL, compute_dtype=jnp.float32,
                                    tn=256, tk=256)
    outS = jax.block_until_ready(lora_injected_linear(xL, pS, scale=1.0, tm=256))
    assert jnp.allclose(outS, refL, atol=1e-3, rtol=1e-3)

    print("KERNEL_OK")
</pallas_src>

<mosaic_0001>
module attributes {stable_mosaic.version = 11 : i64} {
  func.func @_lora_linear_kernel(%arg0: i32, %arg1: i32, %arg2: i32, %arg3: memref<16x256xf32, #tpu.memory_space<vmem>>, %arg4: memref<256x256xf32, #tpu.memory_space<vmem>>, %arg5: memref<16x8xf32, #tpu.memory_space<vmem>>, %arg6: memref<8x256xf32, #tpu.memory_space<vmem>>, %arg7: memref<16x256xf32, #tpu.memory_space<vmem>>, %arg8: memref<16x256xf32, #tpu.memory_space<vmem>>) attributes {dimension_semantics = [#tpu.dimension_semantics<parallel>, #tpu.dimension_semantics<parallel>, #tpu.dimension_semantics<arbitrary>], iteration_bounds = array<i64: 1, 1, 1>, scalar_prefetch = 0 : i64, scratch_operands = 1 : i64, tpu.core_type = #tpu.core_type<tc>, window_params = [{transform_indices = @transform_0, window_bounds = array<i64: 16, 256>}, {transform_indices = @transform_1, window_bounds = array<i64: 256, 256>}, {transform_indices = @transform_2, window_bounds = array<i64: 16, 8>}, {transform_indices = @transform_3, window_bounds = array<i64: 8, 256>}, {transform_indices = @transform_4, window_bounds = array<i64: 16, 256>}]} {
    %c0_i32 = arith.constant 0 : i32
    %0 = arith.cmpi eq, %arg2, %c0_i32 : i32
    %1 = arith.extui %0 : i1 to i32
    %c0_i32_0 = arith.constant 0 : i32
    %2 = arith.cmpi ne, %1, %c0_i32_0 : i32
    scf.if %2 {
      %cst_10 = arith.constant 0.000000e+00 : f32
      %12 = vector.broadcast %cst_10 : f32 to vector<16x256xf32>
      %c0_11 = arith.constant 0 : index
      %c0_12 = arith.constant 0 : index
      %13 = vector.load %arg8[%c0_11, %c0_12] : memref<16x256xf32, #tpu.memory_space<vmem>>, vector<16x256xf32>
      tpu.vector_store %arg8[%c0_11, %c0_12], %12 {strides = array<i32>} : memref<16x256xf32, #tpu.memory_space<vmem>>, vector<16x256xf32>,
    } else {
    }
    %c0 = arith.constant 0 : index
    %c0_1 = arith.constant 0 : index
    %3 = vector.load %arg8[%c0, %c0_1] : memref<16x256xf32, #tpu.memory_space<vmem>>, vector<16x256xf32>
    %c0_2 = arith.constant 0 : index
    %c0_3 = arith.constant 0 : index
    %4 = vector.load %arg3[%c0_2, %c0_3] : memref<16x256xf32, #tpu.memory_space<vmem>>, vector<16x256xf32>
    %c0_4 = arith.constant 0 : index
    %c0_5 = arith.constant 0 : index
    %5 = vector.load %arg4[%c0_4, %c0_5] : memref<256x256xf32, #tpu.memory_space<vmem>>, vector<256x256xf32>
    %cst = arith.constant dense<0.000000e+00> : vector<16x256xf32>
    %6 = tpu.matmul %4, %5, %cst {dimension_numbers = #tpu.dot_dimension_numbers<[1], [0], [0], [1], [0, 0, 1, 1], [], []>} : vector<16x256xf32>, vector<256x256xf32>, vector<16x256xf32> -> vector<16x256xf32>
    %7 = arith.addf %3, %6 : vector<16x256xf32>
    %c0_6 = arith.constant 0 : index
    %c0_7 = arith.constant 0 : index
    %8 = vector.load %arg8[%c0_6, %c0_7] : memref<16x256xf32, #tpu.memory_space<vmem>>, vector<16x256xf32>
    tpu.vector_store %arg8[%c0_6, %c0_7], %7 {strides = array<i32>} : memref<16x256xf32, #tpu.memory_space<vmem>>, vector<16x256xf32>,
    %c0_i32_8 = arith.constant 0 : i32
    %9 = arith.cmpi eq, %arg2, %c0_i32_8 : i32
    %10 = arith.extui %9 : i1 to i32
    %c0_i32_9 = arith.constant 0 : i32
    %11 = arith.cmpi ne, %10, %c0_i32_9 : i32
    scf.if %11 {
      %c0_10 = arith.constant 0 : index
      %c0_11 = arith.constant 0 : index
      %12 = vector.load %arg5[%c0_10, %c0_11] : memref<16x8xf32, #tpu.memory_space<vmem>>, vector<16x8xf32>
      %c0_12 = arith.constant 0 : index
      %c0_13 = arith.constant 0 : index
      %13 = vector.load %arg6[%c0_12, %c0_13] : memref<8x256xf32, #tpu.memory_space<vmem>>, vector<8x256xf32>
      %cst_14 = arith.constant dense<0.000000e+00> : vector<16x256xf32>
      %14 = tpu.matmul %12, %13, %cst_14 {dimension_numbers = #tpu.dot_dimension_numbers<[1], [0], [0], [1], [0, 0, 1, 1], [], []>} : vector<16x8xf32>, vector<8x256xf32>, vector<16x256xf32> -> vector<16x256xf32>
      %c0_15 = arith.constant 0 : index
      %c0_16 = arith.constant 0 : index
      %15 = vector.load %arg8[%c0_15, %c0_16] : memref<16x256xf32, #tpu.memory_space<vmem>>, vector<16x256xf32>
      %16 = arith.addf %15, %14 : vector<16x256xf32>
      %c0_17 = arith.constant 0 : index
      %c0_18 = arith.constant 0 : index
      %17 = vector.load %arg7[%c0_17, %c0_18] : memref<16x256xf32, #tpu.memory_space<vmem>>, vector<16x256xf32>
      tpu.vector_store %arg7[%c0_17, %c0_18], %16 {strides = array<i32>} : memref<16x256xf32, #tpu.memory_space<vmem>>, vector<16x256xf32>,
    } else {
    }
    return
  }
  func.func @transform_0(%arg0: i32, %arg1: i32, %arg2: i32) -> (i32, i32) {
    %c0_i32 = arith.constant 0 : i32
    return %arg0, %arg2 : i32, i32
  }
  func.func @transform_1(%arg0: i32, %arg1: i32, %arg2: i32) -> (i32, i32) {
    %c0_i32 = arith.constant 0 : i32
    return %arg2, %arg1 : i32, i32
  }
  func.func @transform_2(%arg0: i32, %arg1: i32, %arg2: i32) -> (i32, i32) {
    %c0_i32 = arith.constant 0 : i32
    %c0_i32_0 = arith.constant 0 : i32
    return %arg0, %c0_i32 : i32, i32
  }
  func.func @transform_3(%arg0: i32, %arg1: i32, %arg2: i32) -> (i32, i32) {
    %c0_i32 = arith.constant 0 : i32
    %c0_i32_0 = arith.constant 0 : i32
    return %c0_i32, %arg1 : i32, i32
  }
  func.func @transform_4(%arg0: i32, %arg1: i32, %arg2: i32) -> (i32, i32) {
    %c0_i32 = arith.constant 0 : i32
    return %arg0, %arg1 : i32, i32
  }
}

</mosaic_0001>

<llo_original>
// kernel: tpu_custom_call.1
$region0: #{tpu_custom_call.1}
  #allocation0 [shape = 'u32[]', space=smem, size = 0x4, offset = 0x4, fixed_abs, tag = 'smem constant byte address 0x4 - core index']
  #allocation1 [shape = 'u32[72,128]{1,0:T(1,128)}', space=vmem, size = 0x9000, scoped, tag = 'internal scratch']
  #allocation2 [shape = 'f32[16,256]{1,0:T(8,128)}', space=vmem, size = 0x4000, scoped, tag = 'scratch operand']
  %s0 = inlined_call_operand.hbm [shape: f32[16,256], index: 0, kind: input, shape index: {}]
  %s1 = inlined_call_operand.hbm [shape: f32[256,256], index: 1, kind: input, shape index: {}]
  %s2 = inlined_call_operand.vmem [shape: f32[16,8], index: 2, kind: input, shape index: {}]
  %s3 = inlined_call_operand.vmem [shape: f32[8,256], index: 3, kind: input, shape index: {}]
  %s4 = inlined_call_operand.hbm [shape: f32[16,256], index: 4, kind: output, shape index: {}]
  %s5 = sld [smem:[#allocation0]]
  $region42: #{tpu_custom_call.1} parent=0
    _
  %s7 = ssub.s32 1, %s5
  %s8 = scalar_select 0, %s7, %s5
  $region1: #{tpu_custom_call.1} parent=0
    #allocation3 [shape = 'u8[16384]{0}', space=vmem, size = 0x4000, scoped, tag = 'input window, operand 0, single buffered']
    #allocation4 [shape = 's32[1]{0}', space=sflag, size = 0x4, scoped, tag = 'scoped memory for tpu_custom_call.1']
    #allocation5 [shape = 's32[1]{0}', space=sflag, size = 0x4, scoped, tag = 'scoped memory for tpu_custom_call.1']
    #allocation6 [shape = 'u8[262144]{0}', space=vmem, size = 0x40000, scoped, tag = 'input window, operand 1, single buffered']
    #allocation7 [shape = 's32[1]{0}', space=sflag, size = 0x4, scoped, tag = 'scoped memory for tpu_custom_call.1']
    #allocation8 [shape = 'u8[16384]{0}', space=vmem, size = 0x4000, scoped, tag = 'output window, operand 0, single buffered']
    %9 = vsyncpa [#allocation4], 0
    %10 = vsyncpa [#allocation7], 0
    %11 = vsyncpa [#allocation5], 0
    // Predicated region
    $region2: #{tpu_custom_call.1} parent=1 // pred_check
      _
    $region3: #{tpu_custom_call.1} parent=1 // pred_check_branch
      %13 = sbr.rel (0) target = $region5
    $region4: #{tpu_custom_call.1} parent=1 // pred_region
      %15 = vsyncadd [#allocation4], 0
      %s16 = sshll.u32 %s0, 4
      %s17 = int_to_ptr.hbm [resolvable:$true] %s16
      %s18 = sshll.u32 [#allocation3], 4
      %s19 = int_to_ptr.vmem [resolvable:$true] %s18
      %24 = dma.hbm_to_vmem [thread:$0]  %s17, 512, %s19, [#allocation4], 256, 256, 16
    $region5: #{tpu_custom_call.1} parent=1 // pred_fallthru
      _
    // Predicated region
    $region6: #{tpu_custom_call.1} parent=1 // pred_check
      _
    $region7: #{tpu_custom_call.1} parent=1 // pred_check_branch
      %26 = sbr.rel (0) target = $region9
    $region8: #{tpu_custom_call.1} parent=1 // pred_region
      %28 = vsyncadd [#allocation7], 0
      %s29 = sshll.u32 %s1, 4
      %s30 = int_to_ptr.hbm [resolvable:$true] %s29
      %s31 = sshll.u32 [#allocation6], 4
      %s32 = int_to_ptr.vmem [resolvable:$true] %s31
      %37 = dma.hbm_to_vmem [thread:$0]  %s30, 8192, %s32, [#allocation7], 256, 256, 16
    $region9: #{tpu_custom_call.1} parent=1 // pred_fallthru
      _
    // Predicated region
    $region10: #{tpu_custom_call.1} parent=1 // pred_check
      _
    $region11: #{tpu_custom_call.1} parent=1 // pred_check_branch
      %39 = sbr.rel (0) target = $region13
    $region12: #{tpu_custom_call.1} parent=1 // pred_region
      _
    $region13: #{tpu_custom_call.1} parent=1 // pred_fallthru
      _
    // Predicated region
    $region14: #{tpu_custom_call.1} parent=1 // pred_check
      _
    $region15: #{tpu_custom_call.1} parent=1 // pred_check_branch
      %41 = sbr.rel (0) target = $region17
    $region16: #{tpu_custom_call.1} parent=1 // pred_region
      _
    $region17: #{tpu_custom_call.1} parent=1 // pred_fallthru
      _
    // Predicated region
    $region18: #{tpu_custom_call.1} parent=1 // pred_check
      _
    $region19: #{tpu_custom_call.1} parent=1 // pred_check_branch
      %43 = sbr.rel (0) target = $region21
    $region20: #{tpu_custom_call.1} parent=1 // pred_region
      %45 = dma.done [#allocation4], 512
    $region21: #{tpu_custom_call.1} parent=1 // pred_fallthru
      _
    // Predicated region
    $region22: #{tpu_custom_call.1} parent=1 // pred_check
      _
    $region23: #{tpu_custom_call.1} parent=1 // pred_check_branch
      %47 = sbr.rel (0) target = $region25
    $region24: #{tpu_custom_call.1} parent=1 // pred_region
      %49 = dma.done [#allocation7], 8192
    $region25: #{tpu_custom_call.1} parent=1 // pred_fallthru
      _
    %p50 = scmp.eq.s32.totalorder 0, 0
    // Predicated region
    $region26: #{tpu_custom_call.1} parent=1 // pred_check
      %p51 = pneg %p50
    $region27: #{tpu_custom_call.1} parent=1 // pred_check_branch
      %53 = sbr.rel (%p51) target = $region29
    $region28: #{tpu_custom_call.1} parent=1 // pred_region
      %54 = vst [vmem:[#allocation2] sm:$0xff] 0.0
      %55 = vst [vmem:[#allocation2 + $0x8] sm:$0xff] 0.0
      %56 = vst [vmem:[#allocation2 + $0x10] sm:$0xff] 0.0
      %57 = vst [vmem:[#allocation2 + $0x18] sm:$0xff] 0.0
    $region29: #{tpu_custom_call.1} parent=1 // pred_fallthru
      _
    %v58 = vld [vmem:[#allocation2] sm:$0xff]
    %v59 = vld [vmem:[#allocation2 + $0x8] sm:$0xff]
    %v60 = vld [vmem:[#allocation2 + $0x10] sm:$0xff]
    %v61 = vld [vmem:[#allocation2 + $0x18] sm:$0xff]
    %v62 = vld [vmem:[#allocation3] sm:$0xff]
    %v63 = vld [vmem:[#allocation3 + $0x8] sm:$0xff]
    %v64 = vld [vmem:[#allocation3 + $0x10] sm:$0xff]
    %v65 = vld [vmem:[#allocation3 + $0x18] sm:$0xff]
    %v66 = vld [vmem:[#allocation6] sm:$0xff]
    %v67 = vld [vmem:[#allocation6 + $0x8] sm:$0xff]
    %v68 = vld [vmem:[#allocation6 + $0x10] sm:$0xff]
    %v69 = vld [vmem:[#allocation6 + $0x18] sm:$0xff]
    %v70 = vld [vmem:[#allocation6 + $0x20] sm:$0xff]
    %v71 = vld [vmem:[#allocation6 + $0x28] sm:$0xff]
    %v72 = vld [vmem:[#allocation6 + $0x30] sm:$0xff]
    %v73 = vld [vmem:[#allocation6 + $0x38] sm:$0xff]
    %v74 = vld [vmem:[#allocation6 + $0x40] sm:$0xff]
    %v75 = vld [vmem:[#allocation6 + $0x48] sm:$0xff]
    %v76 = vld [vmem:[#allocation6 + $0x50] sm:$0xff]
    %v77 = vld [vmem:[#allocation6 + $0x58] sm:$0xff]
    %v78 = vld [vmem:[#allocation6 + $0x60] sm:$0xff]
    %v79 = vld [vmem:[#allocation6 + $0x68] sm:$0xff]
    %v80 = vld [vmem:[#allocation6 + $0x70] sm:$0xff]
    %v81 = vld [vmem:[#allocation6 + $0x78] sm:$0xff]
    %v82 = vld [vmem:[#allocation6 + $0x80] sm:$0xff]
    %v83 = vld [vmem:[#allocation6 + $0x88] sm:$0xff]
    %v84 = vld [vmem:[#allocation6 + $0x90] sm:$0xff]
    %v85 = vld [vmem:[#allocation6 + $0x98] sm:$0xff]
    %v86 = vld [vmem:[#allocation6 + $0xa0] sm:$0xff]
    %v87 = vld [vmem:[#allocation6 + $0xa8] sm:$0xff]
    %v88 = vld [vmem:[#allocation6 + $0xb0] sm:$0xff]
    %v89 = vld [vmem:[#allocation6 + $0xb8] sm:$0xff]
    %v90 = vld [vmem:[#allocation6 + $0xc0] sm:$0xff]
    %v91 = vld [vmem:[#allocation6 + $0xc8] sm:$0xff]
    %v92 = vld [vmem:[#allocation6 + $0xd0] sm:$0xff]
    %v93 = vld [vmem:[#allocation6 + $0xd8] sm:$0xff]
    %v94 = vld [vmem:[#allocation6 + $0xe0] sm:$0xff]
    %v95 = vld [vmem:[#allocation6 + $0xe8] sm:$0xff]
    %v96 = vld [vmem:[#allocation6 + $0xf0] sm:$0xff]
    %v97 = vld [vmem:[#allocation6 + $0xf8] sm:$0xff]
    %v98 = vld [vmem:[#allocation6 + $0x100] sm:$0xff]
    %v99 = vld [vmem:[#allocation6 + $0x108] sm:$0xff]
    %v100 = vld [vmem:[#allocation6 + $0x110] sm:$0xff]
    %v101 = vld [vmem:[#allocation6 + $0x118] sm:$0xff]
    %v102 = vld [vmem:[#allocation6 + $0x120] sm:$0xff]
    %v103 = vld [vmem:[#allocation6 + $0x128] sm:$0xff]
    %v104 = vld [vmem:[#allocation6 + $0x130] sm:$0xff]
    %v105 = vld [vmem:[#allocation6 + $0x138] sm:$0xff]
    %v106 = vld [vmem:[#allocation6 + $0x140] sm:$0xff]
    %v107 = vld [vmem:[#allocation6 + $0x148] sm:$0xff]
    %v108 = vld [vmem:[#allocation6 + $0x150] sm:$0xff]
    %v109 = vld [vmem:[#allocation6 + $0x158] sm:$0xff]
    %v110 = vld [vmem:[#allocation6 + $0x160] sm:$0xff]
    %v111 = vld [vmem:[#allocation6 + $0x168] sm:$0xff]
    %v112 = vld [vmem:[#allocation6 + $0x170] sm:$0xff]
    %v113 = vld [vmem:[#allocation6 + $0x178] sm:$0xff]
    %v114 = vld [vmem:[#allocation6 + $0x180] sm:$0xff]
    %v115 = vld [vmem:[#allocation6 + $0x188] sm:$0xff]
    %v116 = vld [vmem:[#allocation6 + $0x190] sm:$0xff]
    %v117 = vld [vmem:[#allocation6 + $0x198] sm:$0xff]
    %v118 = vld [vmem:[#allocation6 + $0x1a0] sm:$0xff]
    %v119 = vld [vmem:[#allocation6 + $0x1a8] sm:$0xff]
    %v120 = vld [vmem:[#allocation6 + $0x1b0] sm:$0xff]
    %v121 = vld [vmem:[#allocation6 + $0x1b8] sm:$0xff]
    %v122 = vld [vmem:[#allocation6 + $0x1c0] sm:$0xff]
    %v123 = vld [vmem:[#allocation6 + $0x1c8] sm:$0xff]
    %v124 = vld [vmem:[#allocation6 + $0x1d0] sm:$0xff]
    %v125 = vld [vmem:[#allocation6 + $0x1d8] sm:$0xff]
    %v126 = vld [vmem:[#allocation6 + $0x1e0] sm:$0xff]
    %v127 = vld [vmem:[#allocation6 + $0x1e8] sm:$0xff]
    %v128 = vld [vmem:[#allocation6 + $0x1f0] sm:$0xff]
    %v129 = vld [vmem:[#allocation6 + $0x1f8] sm:$0xff]
    %130 = vmatpush.msra.mxu0 %v96
    %131 = vmatpush.msra.mxu0 %v94
    %132 = vmatpush.msra.mxu0 %v92
    %133 = vmatpush.msra.mxu0 %v90
    %134 = vmatpush.msra.mxu0 %v88
    %135 = vmatpush.msra.mxu0 %v86
    %136 = vmatpush.msra.mxu0 %v84
    %137 = vmatpush.msra.mxu0 %v82
    %138 = vmatpush.msra.mxu0 %v80
    %139 = vmatpush.msra.mxu0 %v78
    %140 = vmatpush.msra.mxu0 %v76
    %141 = vmatpush.msra.mxu0 %v74
    %142 = vmatpush.msra.mxu0 %v72
    %143 = vmatpush.msra.mxu0 %v70
    %144 = vmatpush.msra.mxu0 %v68
    %145 = vmatpush.msra.mxu0 %v66
    %146 = vmatmul.f32.gmra.mxu0 %v62
    %v147 = vpop.f32.mrf.mxu0
    %v148 = vadd.f32 0.0, %v147
    %149 = vmatmul.f32.gmra.mxu0 %v64
    %v150 = vpop.f32.mrf.mxu0
    %v151 = vadd.f32 0.0, %v150
    %152 = vdwg.mxu0
    %153 = vmatpush.msra.mxu0 %v128
    %154 = vmatpush.msra.mxu0 %v126
    %155 = vmatpush.msra.mxu0 %v124
    %156 = vmatpush.msra.mxu0 %v122
    %157 = vmatpush.msra.mxu0 %v120
    %158 = vmatpush.msra.mxu0 %v118
    %159 = vmatpush.msra.mxu0 %v116
    %160 = vmatpush.msra.mxu0 %v114
    %161 = vmatpush.msra.mxu0 %v112
    %162 = vmatpush.msra.mxu0 %v110
    %163 = vmatpush.msra.mxu0 %v108
    %164 = vmatpush.msra.mxu0 %v106
    %165 = vmatpush.msra.mxu0 %v104
    %166 = vmatpush.msra.mxu0 %v102
    %167 = vmatpush.msra.mxu0 %v100
    %168 = vmatpush.msra.mxu0 %v98
    %169 = vmatmul.f32.gmra.mxu0 %v63
    %v170 = vpop.f32.mrf.mxu0
    %v171 = vadd.f32 %v148, %v170
    %172 = vmatmul.f32.gmra.mxu0 %v65
    %v173 = vpop.f32.mrf.mxu0
    %v174 = vadd.f32 %v151, %v173
    %175 = vdwg.mxu0
    %176 = vmatpush.msra.mxu0 %v97
    %177 = vmatpush.msra.mxu0 %v95
    %178 = vmatpush.msra.mxu0 %v93
    %179 = vmatpush.msra.mxu0 %v91
    %180 = vmatpush.msra.mxu0 %v89
    %181 = vmatpush.msra.mxu0 %v87
    %182 = vmatpush.msra.mxu0 %v85
    %183 = vmatpush.msra.mxu0 %v83
    %184 = vmatpush.msra.mxu0 %v81
    %185 = vmatpush.msra.mxu0 %v79
    %186 = vmatpush.msra.mxu0 %v77
    %187 = vmatpush.msra.mxu0 %v75
    %188 = vmatpush.msra.mxu0 %v73
    %189 = vmatpush.msra.mxu0 %v71
    %190 = vmatpush.msra.mxu0 %v69
    %191 = vmatpush.msra.mxu0 %v67
    %192 = vmatmul.f32.gmra.mxu0 %v62
    %v193 = vpop.f32.mrf.mxu0
    %v194 = vadd.f32 0.0, %v193
    %195 = vmatmul.f32.gmra.mxu0 %v64
    %v196 = vpop.f32.mrf.mxu0
    %v197 = vadd.f32 0.0, %v196
    %198 = vdwg.mxu0
    %199 = vmatpush.msra.mxu0 %v129
    %200 = vmatpush.msra.mxu0 %v127
    %201 = vmatpush.msra.mxu0 %v125
    %202 = vmatpush.msra.mxu0 %v123
    %203 = vmatpush.msra.mxu0 %v121
    %204 = vmatpush.msra.mxu0 %v119
    %205 = vmatpush.msra.mxu0 %v117
    %206 = vmatpush.msra.mxu0 %v115
    %207 = vmatpush.msra.mxu0 %v113
    %208 = vmatpush.msra.mxu0 %v111
    %209 = vmatpush.msra.mxu0 %v109
    %210 = vmatpush.msra.mxu0 %v107
    %211 = vmatpush.msra.mxu0 %v105
    %212 = vmatpush.msra.mxu0 %v103
    %213 = vmatpush.msra.mxu0 %v101
    %214 = vmatpush.msra.mxu0 %v99
    %215 = vmatmul.f32.gmra.mxu0 %v63
    %v216 = vpop.f32.mrf.mxu0
    %v217 = vadd.f32 %v194, %v216
    %218 = vmatmul.f32.gmra.mxu0 %v65
    %v219 = vpop.f32.mrf.mxu0
    %v220 = vadd.f32 %v197, %v219
    %221 = vdwg.mxu0
    %v222 = vadd.f32 %v58, %v171
    %v223 = vadd.f32 %v59, %v217
    %v224 = vadd.f32 %v60, %v174
    %v225 = vadd.f32 %v61, %v220
    %226 = vst [vmem:[#allocation2] sm:$0xff] %v222
    %227 = vst [vmem:[#allocation2 + $0x8] sm:$0xff] %v223
    %228 = vst [vmem:[#allocation2 + $0x10] sm:$0xff] %v224
    %229 = vst [vmem:[#allocation2 + $0x18] sm:$0xff] %v225
    // Predicated region
    $region30: #{tpu_custom_call.1} parent=1 // pred_check
      %p230 = pneg %p50
    $region31: #{tpu_custom_call.1} parent=1 // pred_check_branch
      %232 = sbr.rel (%p230) target = $region33
    $region32: #{tpu_custom_call.1} parent=1 // pred_region
      %v233 = vld [vmem:[%s2] sm:$0xff]
      %v234 = vld [vmem:[%s2 + $0x8] sm:$0xff]
      %v235 = vld [vmem:[%s3] sm:$0xff]
      %v236 = vld [vmem:[%s3 + $0x8] sm:$0xff]
      %vm237 = vcmask 64512
      %v239 = vsel %vm237, %v233, 0
      %v242 = vsel %vm237, %v234, 0
      %244 = vmatpush.msra.mxu0 0.0
      %245 = vmatpush.msra.mxu0 0.0
      %246 = vmatpush.msra.mxu0 0.0
      %247 = vmatpush.msra.mxu0 0.0
      %248 = vmatpush.msra.mxu0 0.0
      %249 = vmatpush.msra.mxu0 0.0
      %250 = vmatpush.msra.mxu0 0.0
      %251 = vmatpush.msra.mxu0 0.0
      %252 = vmatpush.msra.mxu0 0.0
      %253 = vmatpush.msra.mxu0 0.0
      %254 = vmatpush.msra.mxu0 0.0
      %255 = vmatpush.msra.mxu0 0.0
      %256 = vmatpush.msra.mxu0 0.0
      %257 = vmatpush.msra.mxu0 0.0
      %258 = vmatpush.msra.mxu0 0.0
      %259 = vmatpush.msra.mxu0 %v235
      %260 = vmatmul.f32.gmra.mxu0 %v239
      %v261 = vpop.f32.mrf.mxu0
      %v262 = vadd.f32 0.0, %v261
      %263 = vmatmul.f32.gmra.mxu0 %v242
      %v264 = vpop.f32.mrf.mxu0
      %v265 = vadd.f32 0.0, %v264
      %266 = vdwg.mxu0
      %267 = vmatpush.msra.mxu0 0.0
      %268 = vmatpush.msra.mxu0 0.0
      %269 = vmatpush.msra.mxu0 0.0
      %270 = vmatpush.msra.mxu0 0.0
      %271 = vmatpush.msra.mxu0 0.0
      %272 = vmatpush.msra.mxu0 0.0
      %273 = vmatpush.msra.mxu0 0.0
      %274 = vmatpush.msra.mxu0 0.0
      %275 = vmatpush.msra.mxu0 0.0
      %276 = vmatpush.msra.mxu0 0.0
      %277 = vmatpush.msra.mxu0 0.0
      %278 = vmatpush.msra.mxu0 0.0
      %279 = vmatpush.msra.mxu0 0.0
      %280 = vmatpush.msra.mxu0 0.0
      %281 = vmatpush.msra.mxu0 0.0
      %282 = vmatpush.msra.mxu0 %v236
      %283 = vmatmul.f32.gmra.mxu0 %v239
      %v284 = vpop.f32.mrf.mxu0
      %v285 = vadd.f32 0.0, %v284
      %286 = vmatmul.f32.gmra.mxu0 %v242
      %v287 = vpop.f32.mrf.mxu0
      %v288 = vadd.f32 0.0, %v287
      %289 = vdwg.mxu0
      %v290 = vld [vmem:[#allocation2] sm:$0xff]
      %v291 = vld [vmem:[#allocation2 + $0x8] sm:$0xff]
      %v292 = vld [vmem:[#allocation2 + $0x10] sm:$0xff]
      %v293 = vld [vmem:[#allocation2 + $0x18] sm:$0xff]
      %v294 = vadd.f32 %v290, %v262
      %v295 = vadd.f32 %v291, %v285
      %v296 = vadd.f32 %v292, %v265
      %v297 = vadd.f32 %v293, %v288
      %298 = vst [vmem:[#allocation8] sm:$0xff] %v294
      %299 = vst [vmem:[#allocation8 + $0x8] sm:$0xff] %v295
      %300 = vst [vmem:[#allocation8 + $0x10] sm:$0xff] %v296
      %301 = vst [vmem:[#allocation8 + $0x18] sm:$0xff] %v297
    $region33: #{tpu_custom_call.1} parent=1 // pred_fallthru
      _
    // Predicated region
    $region34: #{tpu_custom_call.1} parent=1 // pred_check
      _
    $region35: #{tpu_custom_call.1} parent=1 // pred_check_branch
      %303 = sbr.rel (0) target = $region37
    $region36: #{tpu_custom_call.1} parent=1 // pred_region
      %305 = vsyncadd [#allocation5], 0
      %s306 = sshll.u32 [#allocation8], 4
      %s307 = int_to_ptr.vmem [resolvable:$true] %s306
      %s308 = sshll.u32 %s4, 4
      %s309 = int_to_ptr.hbm [resolvable:$true] %s308
      %314 = dma.vmem_to_hbm [thread:$0]  %s307, 512, %s309, [#allocation5], 256, 256, 16
    $region37: #{tpu_custom_call.1} parent=1 // pred_fallthru
      _
    // Predicated region
    $region38: #{tpu_custom_call.1} parent=1 // pred_check
      _
    $region39: #{tpu_custom_call.1} parent=1 // pred_check_branch
      %316 = sbr.rel (0) target = $region41
    $region40: #{tpu_custom_call.1} parent=1 // pred_region
      %318 = dma.done [#allocation5], 512
    $region41: #{tpu_custom_call.1} parent=1 // pred_fallthru
      _
    %319 = vsyncpa [#allocation4], 1
    %320 = vsyncpa [#allocation7], 1
    %321 = vsyncpa [#allocation5], 1

</llo_original>
